<compile_context>
chip_gen: v5e
topology: v5e:2x2
jax: 0.10.0
libtpu: 0.0.40
codegen_flags: <defaults>
</compile_context>

<pallas_src>
import jax
import jax.numpy as jnp
from jax.experimental import pallas as pl
from jax.experimental.pallas import tpu as pltpu


def _conv1d_k3_kernel(x_ref, w_ref, b_ref, o_ref, acc_ref):
    """One (batch-tile, Cout-tile, Cin-tile) grid step of a K=3, pad=1 Conv1d.

    x_ref  : (TB, Lp+2, tk)  channels-last input block incl. the conv zero halo
    w_ref  : (3, tk, tn)     weight taps, laid out [tap, Cin, Cout]
    b_ref  : (1, tn)         bias tile
    o_ref  : (TB, Lp, tn)    output block (channels-last, lane-dense)
    acc_ref: (TB, Lp, tn)    f32 VMEM accumulator, persists across the Cin axis
    """
    k = pl.program_id(2)
    TB, Lp, _ = o_ref.shape

    @pl.when(k == 0)
    def _():
        # Fold the bias into the accumulator init: one broadcast per output block
        # instead of a per-k add on the epilogue path.
        acc_ref[...] = jnp.broadcast_to(b_ref[...], acc_ref.shape).astype(jnp.float32)

    # Tap t uses rows [t, t+Lp) of the padded input: y[l] += x_pad[l + t] @ w[t]
    for b in range(TB):
        xb = x_ref[b]                      # (Lp+2, tk)
        acc = acc_ref[b]                   # (Lp, tn) f32
        for t in range(3):
            acc = acc + jnp.dot(xb[t:t + Lp, :], w_ref[t],
                                preferred_element_type=jnp.float32)
        acc_ref[b] = acc

    @pl.when(k == pl.num_programs(2) - 1)
    def _():
        o_ref[...] = acc_ref[...].astype(o_ref.dtype)


def _pick_batch_tile(B, Lp, tk, tn, budget_bytes=20 * 1024 * 1024):
    """Largest divisor of B whose double-buffered per-step footprint fits VMEM."""
    def footprint(tb):
        x_blk = 2 * tb * (Lp + 2) * tk * 4          # input, double-buffered
        o_blk = 2 * tb * Lp * tn * 4                # output, double-buffered
        a_blk = tb * Lp * tn * 4                    # accumulator scratch
        w_blk = 2 * 3 * tk * tn * 4                 # weights, double-buffered
        return x_blk + o_blk + a_blk + w_blk

    tb = B
    while tb > 1 and (B % tb != 0 or footprint(tb) > budget_bytes):
        tb -= 1
    return max(tb, 1)


def conv1d_k3_pallas(x, weight, bias, *, tn=None, tk=None):
    """PyTorch-equivalent of nn.Conv1d(Cin, Cout, kernel_size=3, padding=1).

    x:      [B, Cin, L]    float32
    weight: [Cout, Cin, 3] float32 (PyTorch Conv1d layout)
    bias:   [Cout]         float32
    returns [B, Cout, L]   float32
    """
    B, Cin, L = x.shape
    Cout = weight.shape[0]

    LANE, SUB = 128, 8
    Cin_p = pl.cdiv(Cin, LANE) * LANE
    Cout_p = pl.cdiv(Cout, LANE) * LANE
    Lp = pl.cdiv(L, SUB) * SUB

    # 128-multiple tiles; prefer 256 on the MXU contraction / output dims if possible.
    if tk is None:
        tk = 256 if Cin_p % 256 == 0 else 128
    if tn is None:
        tn = 256 if Cout_p % 256 == 0 else 128

    TB = _pick_batch_tile(B, Lp, tk, tn)

    # ---- layout plumbing (outside the kernel) -------------------------------
    # channels-last so Cin is the contraction (lane) dim and Cout is a lane-dense
    # output; L gets 1 leading zero (conv padding) and 1 + (Lp - L) trailing zeros
    # (conv padding + sublane alignment).
    x_nlc = jnp.transpose(x, (0, 2, 1))                                  # [B, L, Cin]
    x_pad = jnp.pad(x_nlc, ((0, 0), (1, 1 + Lp - L), (0, Cin_p - Cin)))  # [B, Lp+2, Cin_p]

    w_kio = jnp.transpose(weight, (2, 1, 0))                             # [3, Cin, Cout]
    w_pad = jnp.pad(w_kio, ((0, 0), (0, Cin_p - Cin), (0, Cout_p - Cout)))
    b_pad = jnp.pad(bias, (0, Cout_p - Cout)).reshape(1, Cout_p)

    grid = (B // TB, Cout_p // tn, Cin_p // tk)

    flops = 2 * B * Lp * 3 * Cin_p * Cout_p
    bytes_accessed = 4 * (x_pad.size + w_pad.size + b_pad.size + B * Lp * Cout_p)

    out = pl.pallas_call(
        _conv1d_k3_kernel,
        out_shape=jax.ShapeDtypeStruct((B, Lp, Cout_p), x.dtype),
        grid_spec=pltpu.PrefetchScalarGridSpec(
            num_scalar_prefetch=0,
            grid=grid,
            in_specs=[
                pl.BlockSpec((TB, Lp + 2, tk), lambda b, j, k: (b, 0, k)),
                pl.BlockSpec((3, tk, tn), lambda b, j, k: (0, k, j)),
                pl.BlockSpec((1, tn), lambda b, j, k: (0, j)),
            ],
            out_specs=pl.BlockSpec((TB, Lp, tn), lambda b, j, k: (b, 0, j)),
            scratch_shapes=[pltpu.VMEM((TB, Lp, tn), jnp.float32)],
        ),
        compiler_params=pltpu.CompilerParams(
            dimension_semantics=("parallel", "parallel", "arbitrary"),
            vmem_limit_bytes=32 * 1024 * 1024,
        ),
        cost_estimate=pl.CostEstimate(
            flops=flops, transcendentals=0, bytes_accessed=bytes_accessed),
    )(x_pad, w_pad, b_pad)

    # Strip length / channel padding, back to PyTorch's [B, Cout, L] layout.
    return jnp.transpose(out[:, :L, :Cout], (0, 2, 1))


if __name__ == "__main__":
    # Small shapes consistent with GraphConvLayer(in_channels=16, out_channels=32)
    # applied to a [batch, channels, length] signal.
    batch, in_channels, out_channels, length = 2, 16, 32, 64

    key = jax.random.PRNGKey(0)
    kx, kw, kb = jax.random.split(key, 3)

    x = jax.random.normal(kx, (batch, in_channels, length), dtype=jnp.float32)

    # Deterministic PyTorch-style Conv1d init: U(-1/sqrt(fan_in), 1/sqrt(fan_in)),
    # fan_in = in_channels * kernel_size.
    fan_in = in_channels * 3
    bound = 1.0 / (fan_in ** 0.5)
    weight = jax.random.uniform(
        kw, (out_channels, in_channels, 3),
        minval=-bound, maxval=bound, dtype=jnp.float32)        # PyTorch layout [out, in, k]
    bias = jax.random.uniform(
        kb, (out_channels,), minval=-bound, maxval=bound, dtype=jnp.float32)

    y = conv1d_k3_pallas(x, weight, bias)
    jax.block_until_ready(y)

    # Pure-JAX reference: identical Conv1d(kernel_size=3, padding=1) math.
    x_ref_pad = jnp.pad(x, ((0, 0), (0, 0), (1, 1)))           # [B, Cin, L+2]
    y_ref = bias[None, :, None]
    for t in range(3):
        y_ref = y_ref + jnp.einsum(
            'bcl,oc->bol', x_ref_pad[:, :, t:t + length], weight[:, :, t])

    assert y.shape == (batch, out_channels, length)
    assert jnp.allclose(y, y_ref, atol=1e-4, rtol=1e-4), \
        float(jnp.max(jnp.abs(y - y_ref)))

    print("KERNEL_OK")
</pallas_src>

<mosaic_0001>
module attributes {stable_mosaic.version = 11 : i64} {
  func.func @_conv1d_k3_kernel(%arg0: i32, %arg1: i32, %arg2: i32, %arg3: memref<2x66x128xf32, #tpu.memory_space<vmem>>, %arg4: memref<3x128x128xf32, #tpu.memory_space<vmem>>, %arg5: memref<1x128xf32, #tpu.memory_space<vmem>>, %arg6: memref<2x64x128xf32, #tpu.memory_space<vmem>>, %arg7: memref<2x64x128xf32, #tpu.memory_space<vmem>>) attributes {dimension_semantics = [#tpu.dimension_semantics<parallel>, #tpu.dimension_semantics<parallel>, #tpu.dimension_semantics<arbitrary>], iteration_bounds = array<i64: 1, 1, 1>, scalar_prefetch = 0 : i64, scratch_operands = 1 : i64, tpu.core_type = #tpu.core_type<tc>, window_params = [{transform_indices = @transform_0, window_bounds = array<i64: 2, 66, 128>}, {transform_indices = @transform_1, window_bounds = array<i64: 3, 128, 128>}, {transform_indices = @transform_2, window_bounds = array<i64: 1, 128>}, {transform_indices = @transform_3, window_bounds = array<i64: 2, 64, 128>}]} {
    %c0_i32 = arith.constant 0 : i32
    %0 = arith.cmpi eq, %arg2, %c0_i32 : i32
    %1 = arith.extui %0 : i1 to i32
    %c0_i32_0 = arith.constant 0 : i32
    %2 = arith.cmpi ne, %1, %c0_i32_0 : i32
    scf.if %2 {
      %c0_41 = arith.constant 0 : index
      %c0_42 = arith.constant 0 : index
      %50 = vector.load %arg5[%c0_41, %c0_42] : memref<1x128xf32, #tpu.memory_space<vmem>>, vector<1x128xf32>
      %51 = vector.shape_cast %50 : vector<1x128xf32> to vector<1x1x128xf32>
      %52 = vector.broadcast %51 : vector<1x1x128xf32> to vector<2x64x128xf32>
      %c0_43 = arith.constant 0 : index
      %c0_44 = arith.constant 0 : index
      %c0_45 = arith.constant 0 : index
      %53 = vector.load %arg7[%c0_43, %c0_44, %c0_45] : memref<2x64x128xf32, #tpu.memory_space<vmem>>, vector<2x64x128xf32>
      tpu.vector_store %arg7[%c0_43, %c0_44, %c0_45], %52 {strides = array<i32>} : memref<2x64x128xf32, #tpu.memory_space<vmem>>, vector<2x64x128xf32>,
    } else {
    }
    %c0 = arith.constant 0 : index
    %c0_1 = arith.constant 0 : index
    %c0_2 = arith.constant 0 : index
    %3 = vector.load %arg3[%c0, %c0_1, %c0_2] : memref<2x66x128xf32, #tpu.memory_space<vmem>>, vector<1x66x128xf32>
    %4 = vector.shape_cast %3 : vector<1x66x128xf32> to vector<66x128xf32>
    %c0_3 = arith.constant 0 : index
    %c0_4 = arith.constant 0 : index
    %c0_5 = arith.constant 0 : index
    %5 = vector.load %arg7[%c0_3, %c0_4, %c0_5] : memref<2x64x128xf32, #tpu.memory_space<vmem>>, vector<1x64x128xf32>
    %6 = vector.shape_cast %5 : vector<1x64x128xf32> to vector<64x128xf32>
    %7 = vector.extract_strided_slice %4 {offsets = [0, 0], sizes = [64, 128], strides = [1, 1]} : vector<66x128xf32> to vector<64x128xf32>
    %c0_6 = arith.constant 0 : index
    %c0_7 = arith.constant 0 : index
    %c0_8 = arith.constant 0 : index
    %8 = vector.load %arg4[%c0_6, %c0_7, %c0_8] : memref<3x128x128xf32, #tpu.memory_space<vmem>>, vector<1x128x128xf32>
    %9 = vector.shape_cast %8 : vector<1x128x128xf32> to vector<128x128xf32>
    %cst = arith.constant dense<0.000000e+00> : vector<64x128xf32>
    %10 = tpu.matmul %7, %9, %cst {dimension_numbers = #tpu.dot_dimension_numbers<[1], [0], [0], [1], [0, 0, 1, 1], [], []>} : vector<64x128xf32>, vector<128x128xf32>, vector<64x128xf32> -> vector<64x128xf32>
    %11 = arith.addf %6, %10 : vector<64x128xf32>
    %12 = vector.extract_strided_slice %4 {offsets = [1, 0], sizes = [64, 128], strides = [1, 1]} : vector<66x128xf32> to vector<64x128xf32>
    %c1 = arith.constant 1 : index
    %c0_9 = arith.constant 0 : index
    %c0_10 = arith.constant 0 : index
    %13 = vector.load %arg4[%c1, %c0_9, %c0_10] : memref<3x128x128xf32, #tpu.memory_space<vmem>>, vector<1x128x128xf32>
    %14 = vector.shape_cast %13 : vector<1x128x128xf32> to vector<128x128xf32>
    %cst_11 = arith.constant dense<0.000000e+00> : vector<64x128xf32>
    %15 = tpu.matmul %12, %14, %cst_11 {dimension_numbers = #tpu.dot_dimension_numbers<[1], [0], [0], [1], [0, 0, 1, 1], [], []>} : vector<64x128xf32>, vector<128x128xf32>, vector<64x128xf32> -> vector<64x128xf32>
    %16 = arith.addf %11, %15 : vector<64x128xf32>
    %17 = vector.extract_strided_slice %4 {offsets = [2, 0], sizes = [64, 128], strides = [1, 1]} : vector<66x128xf32> to vector<64x128xf32>
    %c2 = arith.constant 2 : index
    %c0_12 = arith.constant 0 : index
    %c0_13 = arith.constant 0 : index
    %18 = vector.load %arg4[%c2, %c0_12, %c0_13] : memref<3x128x128xf32, #tpu.memory_space<vmem>>, vector<1x128x128xf32>
    %19 = vector.shape_cast %18 : vector<1x128x128xf32> to vector<128x128xf32>
    %cst_14 = arith.constant dense<0.000000e+00> : vector<64x128xf32>
    %20 = tpu.matmul %17, %19, %cst_14 {dimension_numbers = #tpu.dot_dimension_numbers<[1], [0], [0], [1], [0, 0, 1, 1], [], []>} : vector<64x128xf32>, vector<128x128xf32>, vector<64x128xf32> -> vector<64x128xf32>
    %21 = arith.addf %16, %20 : vector<64x128xf32>
    %c0_15 = arith.constant 0 : index
    %c0_16 = arith.constant 0 : index
    %c0_17 = arith.constant 0 : index
    %22 = vector.load %arg7[%c0_15, %c0_16, %c0_17] : memref<2x64x128xf32, #tpu.memory_space<vmem>>, vector<1x64x128xf32>
    %23 = vector.shape_cast %22 : vector<1x64x128xf32> to vector<64x128xf32>
    %24 = vector.shape_cast %21 : vector<64x128xf32> to vector<1x64x128xf32>
    tpu.vector_store %arg7[%c0_15, %c0_16, %c0_17], %24 {strides = array<i32>} : memref<2x64x128xf32, #tpu.memory_space<vmem>>, vector<1x64x128xf32>,
    %c1_18 = arith.constant 1 : index
    %c0_19 = arith.constant 0 : index
    %c0_20 = arith.constant 0 : index
    %25 = vector.load %arg3[%c1_18, %c0_19, %c0_20] : memref<2x66x128xf32, #tpu.memory_space<vmem>>, vector<1x66x128xf32>
    %26 = vector.shape_cast %25 : vector<1x66x128xf32> to vector<66x128xf32>
    %c1_21 = arith.constant 1 : index
    %c0_22 = arith.constant 0 : index
    %c0_23 = arith.constant 0 : index
    %27 = vector.load %arg7[%c1_21, %c0_22, %c0_23] : memref<2x64x128xf32, #tpu.memory_space<vmem>>, vector<1x64x128xf32>
    %28 = vector.shape_cast %27 : vector<1x64x128xf32> to vector<64x128xf32>
    %29 = vector.extract_strided_slice %26 {offsets = [0, 0], sizes = [64, 128], strides = [1, 1]} : vector<66x128xf32> to vector<64x128xf32>
    %c0_24 = arith.constant 0 : index
    %c0_25 = arith.constant 0 : index
    %c0_26 = arith.constant 0 : index
    %30 = vector.load %arg4[%c0_24, %c0_25, %c0_26] : memref<3x128x128xf32, #tpu.memory_space<vmem>>, vector<1x128x128xf32>
    %31 = vector.shape_cast %30 : vector<1x128x128xf32> to vector<128x128xf32>
    %cst_27 = arith.constant dense<0.000000e+00> : vector<64x128xf32>
    %32 = tpu.matmul %29, %31, %cst_27 {dimension_numbers = #tpu.dot_dimension_numbers<[1], [0], [0], [1], [0, 0, 1, 1], [], []>} : vector<64x128xf32>, vector<128x128xf32>, vector<64x128xf32> -> vector<64x128xf32>
    %33 = arith.addf %28, %32 : vector<64x128xf32>
    %34 = vector.extract_strided_slice %26 {offsets = [1, 0], sizes = [64, 128], strides = [1, 1]} : vector<66x128xf32> to vector<64x128xf32>
    %c1_28 = arith.constant 1 : index
    %c0_29 = arith.constant 0 : index
    %c0_30 = arith.constant 0 : index
    %35 = vector.load %arg4[%c1_28, %c0_29, %c0_30] : memref<3x128x128xf32, #tpu.memory_space<vmem>>, vector<1x128x128xf32>
    %36 = vector.shape_cast %35 : vector<1x128x128xf32> to vector<128x128xf32>
    %cst_31 = arith.constant dense<0.000000e+00> : vector<64x128xf32>
    %37 = tpu.matmul %34, %36, %cst_31 {dimension_numbers = #tpu.dot_dimension_numbers<[1], [0], [0], [1], [0, 0, 1, 1], [], []>} : vector<64x128xf32>, vector<128x128xf32>, vector<64x128xf32> -> vector<64x128xf32>
    %38 = arith.addf %33, %37 : vector<64x128xf32>
    %39 = vector.extract_strided_slice %26 {offsets = [2, 0], sizes = [64, 128], strides = [1, 1]} : vector<66x128xf32> to vector<64x128xf32>
    %c2_32 = arith.constant 2 : index
    %c0_33 = arith.constant 0 : index
    %c0_34 = arith.constant 0 : index
    %40 = vector.load %arg4[%c2_32, %c0_33, %c0_34] : memref<3x128x128xf32, #tpu.memory_space<vmem>>, vector<1x128x128xf32>
    %41 = vector.shape_cast %40 : vector<1x128x128xf32> to vector<128x128xf32>
    %cst_35 = arith.constant dense<0.000000e+00> : vector<64x128xf32>
    %42 = tpu.matmul %39, %41, %cst_35 {dimension_numbers = #tpu.dot_dimension_numbers<[1], [0], [0], [1], [0, 0, 1, 1], [], []>} : vector<64x128xf32>, vector<128x128xf32>, vector<64x128xf32> -> vector<64x128xf32>
    %43 = arith.addf %38, %42 : vector<64x128xf32>
    %c1_36 = arith.constant 1 : index
    %c0_37 = arith.constant 0 : index
    %c0_38 = arith.constant 0 : index
    %44 = vector.load %arg7[%c1_36, %c0_37, %c0_38] : memref<2x64x128xf32, #tpu.memory_space<vmem>>, vector<1x64x128xf32>
    %45 = vector.shape_cast %44 : vector<1x64x128xf32> to vector<64x128xf32>
    %46 = vector.shape_cast %43 : vector<64x128xf32> to vector<1x64x128xf32>
    tpu.vector_store %arg7[%c1_36, %c0_37, %c0_38], %46 {strides = array<i32>} : memref<2x64x128xf32, #tpu.memory_space<vmem>>, vector<1x64x128xf32>,
    %c0_i32_39 = arith.constant 0 : i32
    %47 = arith.cmpi eq, %arg2, %c0_i32_39 : i32
    %48 = arith.extui %47 : i1 to i32
    %c0_i32_40 = arith.constant 0 : i32
    %49 = arith.cmpi ne, %48, %c0_i32_40 : i32
    scf.if %49 {
      %c0_41 = arith.constant 0 : index
      %c0_42 = arith.constant 0 : index
      %c0_43 = arith.constant 0 : index
      %50 = vector.load %arg7[%c0_41, %c0_42, %c0_43] : memref<2x64x128xf32, #tpu.memory_space<vmem>>, vector<2x64x128xf32>
      %c0_44 = arith.constant 0 : index
      %c0_45 = arith.constant 0 : index
      %c0_46 = arith.constant 0 : index
      %51 = vector.load %arg6[%c0_44, %c0_45, %c0_46] : memref<2x64x128xf32, #tpu.memory_space<vmem>>, vector<2x64x128xf32>
      tpu.vector_store %arg6[%c0_44, %c0_45, %c0_46], %50 {strides = array<i32>} : memref<2x64x128xf32, #tpu.memory_space<vmem>>, vector<2x64x128xf32>,
    } else {
    }
    return
  }
  func.func @transform_0(%arg0: i32, %arg1: i32, %arg2: i32) -> (i32, i32, i32) {
    %c0_i32 = arith.constant 0 : i32
    %c0_i32_0 = arith.constant 0 : i32
    return %arg0, %c0_i32, %arg2 : i32, i32, i32
  }
  func.func @transform_1(%arg0: i32, %arg1: i32, %arg2: i32) -> (i32, i32, i32) {
    %c0_i32 = arith.constant 0 : i32
    %c0_i32_0 = arith.constant 0 : i32
    return %c0_i32, %arg2, %arg1 : i32, i32, i32
  }
  func.func @transform_2(%arg0: i32, %arg1: i32, %arg2: i32) -> (i32, i32) {
    %c0_i32 = arith.constant 0 : i32
    %c0_i32_0 = arith.constant 0 : i32
    return %c0_i32, %arg1 : i32, i32
  }
  func.func @transform_3(%arg0: i32, %arg1: i32, %arg2: i32) -> (i32, i32, i32) {
    %c0_i32 = arith.constant 0 : i32
    %c0_i32_0 = arith.constant 0 : i32
    return %arg0, %c0_i32, %arg1 : i32, i32, i32
  }
}

</mosaic_0001>

<llo_original>
// kernel: tpu_custom_call.1
$region0: #{tpu_custom_call.1}
  #allocation0 [shape = 'u32[]', space=smem, size = 0x4, offset = 0x4, fixed_abs, tag = 'smem constant byte address 0x4 - core index']
  #allocation1 [shape = 'u32[72,128]{1,0:T(1,128)}', space=vmem, size = 0x9000, scoped, tag = 'internal scratch']
  #allocation2 [shape = 'f32[2,64,128]{2,1,0:T(8,128)}', space=vmem, size = 0x10000, scoped, tag = 'scratch operand']
  %s0 = inlined_call_operand.vmem [shape: f32[2,66,128], index: 0, kind: input, shape index: {}]
  %s1 = inlined_call_operand.hbm [shape: f32[3,128,128], index: 1, kind: input, shape index: {}]
  %s2 = inlined_call_operand.vmem [shape: f32[1,128], index: 2, kind: input, shape index: {}]
  %s3 = inlined_call_operand.hbm [shape: f32[2,64,128], index: 3, kind: output, shape index: {}]
  %s4 = sld [smem:[#allocation0]]
  $region34: #{tpu_custom_call.1} parent=0
    _
  %s6 = ssub.s32 1, %s4
  %s7 = scalar_select 0, %s6, %s4
  $region1: #{tpu_custom_call.1} parent=0
    #allocation3 [shape = 'u8[196608]{0}', space=vmem, size = 0x30000, scoped, tag = 'input window, operand 1, single buffered']
    #allocation4 [shape = 's32[1]{0}', space=sflag, size = 0x4, scoped, tag = 'scoped memory for tpu_custom_call.1']
    #allocation5 [shape = 's32[1]{0}', space=sflag, size = 0x4, scoped, tag = 'scoped memory for tpu_custom_call.1']
    #allocation6 [shape = 'u8[65536]{0}', space=vmem, size = 0x10000, scoped, tag = 'output window, operand 0, single buffered']
    %8 = vsyncpa [#allocation4], 0
    %9 = vsyncpa [#allocation5], 0
    // Predicated region
    $region2: #{tpu_custom_call.1} parent=1 // pred_check
      _
    $region3: #{tpu_custom_call.1} parent=1 // pred_check_branch
      %11 = sbr.rel (0) target = $region5
    $region4: #{tpu_custom_call.1} parent=1 // pred_region
      _
    $region5: #{tpu_custom_call.1} parent=1 // pred_fallthru
      _
    // Predicated region
    $region6: #{tpu_custom_call.1} parent=1 // pred_check
      _
    $region7: #{tpu_custom_call.1} parent=1 // pred_check_branch
      %13 = sbr.rel (0) target = $region9
    $region8: #{tpu_custom_call.1} parent=1 // pred_region
      %15 = vsyncadd [#allocation4], 0
      %s16 = sshll.u32 %s1, 4
      %s17 = int_to_ptr.hbm [resolvable:$true] %s16
      %s18 = sshll.u32 [#allocation3], 4
      %s19 = int_to_ptr.vmem [resolvable:$true] %s18
      %24 = dma.hbm_to_vmem [thread:$0]  %s17, 6144, %s19, [#allocation4], 128, 128, 8
    $region9: #{tpu_custom_call.1} parent=1 // pred_fallthru
      _
    // Predicated region
    $region10: #{tpu_custom_call.1} parent=1 // pred_check
      _
    $region11: #{tpu_custom_call.1} parent=1 // pred_check_branch
      %26 = sbr.rel (0) target = $region13
    $region12: #{tpu_custom_call.1} parent=1 // pred_region
      _
    $region13: #{tpu_custom_call.1} parent=1 // pred_fallthru
      _
    // Predicated region
    $region14: #{tpu_custom_call.1} parent=1 // pred_check
      _
    $region15: #{tpu_custom_call.1} parent=1 // pred_check_branch
      %28 = sbr.rel (0) target = $region17
    $region16: #{tpu_custom_call.1} parent=1 // pred_region
      %30 = dma.done [#allocation4], 6144
    $region17: #{tpu_custom_call.1} parent=1 // pred_fallthru
      _
    %p31 = scmp.eq.s32.totalorder 0, 0
    // Predicated region
    $region18: #{tpu_custom_call.1} parent=1 // pred_check
      %p32 = pneg %p31
    $region19: #{tpu_custom_call.1} parent=1 // pred_check_branch
      %34 = sbr.rel (%p32) target = $region21
    $region20: #{tpu_custom_call.1} parent=1 // pred_region
      %v35 = vld [vmem:[%s2] sm:$0x1]
      %v37 = vperm.slane %v35, 0
      %39 = vst [vmem:[#allocation2] sm:$0xff] %v37
      %40 = vst [vmem:[#allocation2 + $0x8] sm:$0xff] %v37
      %41 = vst [vmem:[#allocation2 + $0x10] sm:$0xff] %v37
      %42 = vst [vmem:[#allocation2 + $0x18] sm:$0xff] %v37
      %43 = vst [vmem:[#allocation2 + $0x20] sm:$0xff] %v37
      %44 = vst [vmem:[#allocation2 + $0x28] sm:$0xff] %v37
      %45 = vst [vmem:[#allocation2 + $0x30] sm:$0xff] %v37
      %46 = vst [vmem:[#allocation2 + $0x38] sm:$0xff] %v37
      %47 = vst [vmem:[#allocation2 + $0x40] sm:$0xff] %v37
      %48 = vst [vmem:[#allocation2 + $0x48] sm:$0xff] %v37
      %49 = vst [vmem:[#allocation2 + $0x50] sm:$0xff] %v37
      %50 = vst [vmem:[#allocation2 + $0x58] sm:$0xff] %v37
      %51 = vst [vmem:[#allocation2 + $0x60] sm:$0xff] %v37
      %52 = vst [vmem:[#allocation2 + $0x68] sm:$0xff] %v37
      %53 = vst [vmem:[#allocation2 + $0x70] sm:$0xff] %v37
      %54 = vst [vmem:[#allocation2 + $0x78] sm:$0xff] %v37
    $region21: #{tpu_custom_call.1} parent=1 // pred_fallthru
      _
    %v55 = vld [vmem:[%s0] sm:$0xff]
    %v56 = vld [vmem:[%s0 + $0x8] sm:$0xff]
    %v57 = vld [vmem:[%s0 + $0x10] sm:$0xff]
    %v58 = vld [vmem:[%s0 + $0x18] sm:$0xff]
    %v59 = vld [vmem:[%s0 + $0x20] sm:$0xff]
    %v60 = vld [vmem:[%s0 + $0x28] sm:$0xff]
    %v61 = vld [vmem:[%s0 + $0x30] sm:$0xff]
    %v62 = vld [vmem:[%s0 + $0x38] sm:$0xff]
    %v63 = vld [vmem:[%s0 + $0x40] sm:$0x3]
    %v64 = vld [vmem:[#allocation2] sm:$0xff]
    %v65 = vld [vmem:[#allocation2 + $0x8] sm:$0xff]
    %v66 = vld [vmem:[#allocation2 + $0x10] sm:$0xff]
    %v67 = vld [vmem:[#allocation2 + $0x18] sm:$0xff]
    %v68 = vld [vmem:[#allocation2 + $0x20] sm:$0xff]
    %v69 = vld [vmem:[#allocation2 + $0x28] sm:$0xff]
    %v70 = vld [vmem:[#allocation2 + $0x30] sm:$0xff]
    %v71 = vld [vmem:[#allocation2 + $0x38] sm:$0xff]
    %v72 = vld [vmem:[#allocation3] sm:$0xff]
    %v73 = vld [vmem:[#allocation3 + $0x8] sm:$0xff]
    %v74 = vld [vmem:[#allocation3 + $0x10] sm:$0xff]
    %v75 = vld [vmem:[#allocation3 + $0x18] sm:$0xff]
    %v76 = vld [vmem:[#allocation3 + $0x20] sm:$0xff]
    %v77 = vld [vmem:[#allocation3 + $0x28] sm:$0xff]
    %v78 = vld [vmem:[#allocation3 + $0x30] sm:$0xff]
    %v79 = vld [vmem:[#allocation3 + $0x38] sm:$0xff]
    %v80 = vld [vmem:[#allocation3 + $0x40] sm:$0xff]
    %v81 = vld [vmem:[#allocation3 + $0x48] sm:$0xff]
    %v82 = vld [vmem:[#allocation3 + $0x50] sm:$0xff]
    %v83 = vld [vmem:[#allocation3 + $0x58] sm:$0xff]
    %v84 = vld [vmem:[#allocation3 + $0x60] sm:$0xff]
    %v85 = vld [vmem:[#allocation3 + $0x68] sm:$0xff]
    %v86 = vld [vmem:[#allocation3 + $0x70] sm:$0xff]
    %v87 = vld [vmem:[#allocation3 + $0x78] sm:$0xff]
    %88 = vmatpush.msra.mxu0 %v87
    %89 = vmatpush.msra.mxu0 %v86
    %90 = vmatpush.msra.mxu0 %v85
    %91 = vmatpush.msra.mxu0 %v84
    %92 = vmatpush.msra.mxu0 %v83
    %93 = vmatpush.msra.mxu0 %v82
    %94 = vmatpush.msra.mxu0 %v81
    %95 = vmatpush.msra.mxu0 %v80
    %96 = vmatpush.msra.mxu0 %v79
    %97 = vmatpush.msra.mxu0 %v78
    %98 = vmatpush.msra.mxu0 %v77
    %99 = vmatpush.msra.mxu0 %v76
    %100 = vmatpush.msra.mxu0 %v75
    %101 = vmatpush.msra.mxu0 %v74
    %102 = vmatpush.msra.mxu0 %v73
    %103 = vmatpush.msra.mxu0 %v72
    %104 = vmatmul.f32.gmra.mxu0 %v55
    %v105 = vpop.f32.mrf.mxu0
    %v106 = vadd.f32 0.0, %v105
    %107 = vmatmul.f32.gmra.mxu0 %v56
    %v108 = vpop.f32.mrf.mxu0
    %v109 = vadd.f32 0.0, %v108
    %110 = vmatmul.f32.gmra.mxu0 %v57
    %v111 = vpop.f32.mrf.mxu0
    %v112 = vadd.f32 0.0, %v111
    %113 = vmatmul.f32.gmra.mxu0 %v58
    %v114 = vpop.f32.mrf.mxu0
    %v115 = vadd.f32 0.0, %v114
    %116 = vmatmul.f32.gmra.mxu0 %v59
    %v117 = vpop.f32.mrf.mxu0
    %v118 = vadd.f32 0.0, %v117
    %119 = vmatmul.f32.gmra.mxu0 %v60
    %v120 = vpop.f32.mrf.mxu0
    %v121 = vadd.f32 0.0, %v120
    %122 = vmatmul.f32.gmra.mxu0 %v61
    %v123 = vpop.f32.mrf.mxu0
    %v124 = vadd.f32 0.0, %v123
    %125 = vmatmul.f32.gmra.mxu0 %v62
    %v126 = vpop.f32.mrf.mxu0
    %v127 = vadd.f32 0.0, %v126
    %128 = vdwg.mxu0
    %v129 = vadd.f32 %v64, %v106
    %v130 = vadd.f32 %v65, %v109
    %v131 = vadd.f32 %v66, %v112
    %v132 = vadd.f32 %v67, %v115
    %v133 = vadd.f32 %v68, %v118
    %v134 = vadd.f32 %v69, %v121
    %v135 = vadd.f32 %v70, %v124
    %v136 = vadd.f32 %v71, %v127
    %s137 = scalar_lea.vmem [#allocation3], 128
    %v138 = vld [vmem:[%s137] sm:$0xff]
    %v139 = vld [vmem:[%s137 + $0x8] sm:$0xff]
    %v140 = vld [vmem:[%s137 + $0x10] sm:$0xff]
    %v141 = vld [vmem:[%s137 + $0x18] sm:$0xff]
    %v142 = vld [vmem:[%s137 + $0x20] sm:$0xff]
    %v143 = vld [vmem:[%s137 + $0x28] sm:$0xff]
    %v144 = vld [vmem:[%s137 + $0x30] sm:$0xff]
    %v145 = vld [vmem:[%s137 + $0x38] sm:$0xff]
    %v146 = vld [vmem:[%s137 + $0x40] sm:$0xff]
    %v147 = vld [vmem:[%s137 + $0x48] sm:$0xff]
    %v148 = vld [vmem:[%s137 + $0x50] sm:$0xff]
    %v149 = vld [vmem:[%s137 + $0x58] sm:$0xff]
    %v150 = vld [vmem:[%s137 + $0x60] sm:$0xff]
    %v151 = vld [vmem:[%s137 + $0x68] sm:$0xff]
    %v152 = vld [vmem:[%s137 + $0x70] sm:$0xff]
    %v153 = vld [vmem:[%s137 + $0x78] sm:$0xff]
    %vm163 = vcmask 1046528
    %v164 = vrot.slane %v55, 1
    %v165 = vrot.slane %v56, 1
    %v166 = vsel %vm163, %v164, %v165
    %v167 = vrot.slane %v57, 1
    %v168 = vsel %vm163, %v165, %v167
    %v169 = vrot.slane %v58, 1
    %v170 = vsel %vm163, %v167, %v169
    %v171 = vrot.slane %v59, 1
    %v172 = vsel %vm163, %v169, %v171
    %v173 = vrot.slane %v60, 1
    %v174 = vsel %vm163, %v171, %v173
    %v175 = vrot.slane %v61, 1
    %v176 = vsel %vm163, %v173, %v175
    %v177 = vrot.slane %v62, 1
    %v178 = vsel %vm163, %v175, %v177
    %v179 = vrot.slane %v63, 1
    %v180 = vsel %vm163, %v177, %v179
    %189 = vmatpush.msra.mxu0 %v153
    %190 = vmatpush.msra.mxu0 %v152
    %191 = vmatpush.msra.mxu0 %v151
    %192 = vmatpush.msra.mxu0 %v150
    %193 = vmatpush.msra.mxu0 %v149
    %194 = vmatpush.msra.mxu0 %v148
    %195 = vmatpush.msra.mxu0 %v147
    %196 = vmatpush.msra.mxu0 %v146
    %197 = vmatpush.msra.mxu0 %v145
    %198 = vmatpush.msra.mxu0 %v144
    %199 = vmatpush.msra.mxu0 %v143
    %200 = vmatpush.msra.mxu0 %v142
    %201 = vmatpush.msra.mxu0 %v141
    %202 = vmatpush.msra.mxu0 %v140
    %203 = vmatpush.msra.mxu0 %v139
    %204 = vmatpush.msra.mxu0 %v138
    %205 = vmatmul.f32.gmra.mxu0 %v166
    %v206 = vpop.f32.mrf.mxu0
    %v207 = vadd.f32 0.0, %v206
    %208 = vmatmul.f32.gmra.mxu0 %v168
    %v209 = vpop.f32.mrf.mxu0
    %v210 = vadd.f32 0.0, %v209
    %211 = vmatmul.f32.gmra.mxu0 %v170
    %v212 = vpop.f32.mrf.mxu0
    %v213 = vadd.f32 0.0, %v212
    %214 = vmatmul.f32.gmra.mxu0 %v172
    %v215 = vpop.f32.mrf.mxu0
    %v216 = vadd.f32 0.0, %v215
    %217 = vmatmul.f32.gmra.mxu0 %v174
    %v218 = vpop.f32.mrf.mxu0
    %v219 = vadd.f32 0.0, %v218
    %220 = vmatmul.f32.gmra.mxu0 %v176
    %v221 = vpop.f32.mrf.mxu0
    %v222 = vadd.f32 0.0, %v221
    %223 = vmatmul.f32.gmra.mxu0 %v178
    %v224 = vpop.f32.mrf.mxu0
    %v225 = vadd.f32 0.0, %v224
    %226 = vmatmul.f32.gmra.mxu0 %v180
    %v227 = vpop.f32.mrf.mxu0
    %v228 = vadd.f32 0.0, %v227
    %229 = vdwg.mxu0
    %v230 = vadd.f32 %v129, %v207
    %v231 = vadd.f32 %v130, %v210
    %v232 = vadd.f32 %v131, %v213
    %v233 = vadd.f32 %v132, %v216
    %v234 = vadd.f32 %v133, %v219
    %v235 = vadd.f32 %v134, %v222
    %v236 = vadd.f32 %v135, %v225
    %v237 = vadd.f32 %v136, %v228
    %s238 = scalar_lea.vmem [#allocation3], 256
    %v239 = vld [vmem:[%s238] sm:$0xff]
    %v240 = vld [vmem:[%s238 + $0x8] sm:$0xff]
    %v241 = vld [vmem:[%s238 + $0x10] sm:$0xff]
    %v242 = vld [vmem:[%s238 + $0x18] sm:$0xff]
    %v243 = vld [vmem:[%s238 + $0x20] sm:$0xff]
    %v244 = vld [vmem:[%s238 + $0x28] sm:$0xff]
    %v245 = vld [vmem:[%s238 + $0x30] sm:$0xff]
    %v246 = vld [vmem:[%s238 + $0x38] sm:$0xff]
    %v247 = vld [vmem:[%s238 + $0x40] sm:$0xff]
    %v248 = vld [vmem:[%s238 + $0x48] sm:$0xff]
    %v249 = vld [vmem:[%s238 + $0x50] sm:$0xff]
    %v250 = vld [vmem:[%s238 + $0x58] sm:$0xff]
    %v251 = vld [vmem:[%s238 + $0x60] sm:$0xff]
    %v252 = vld [vmem:[%s238 + $0x68] sm:$0xff]
    %v253 = vld [vmem:[%s238 + $0x70] sm:$0xff]
    %v254 = vld [vmem:[%s238 + $0x78] sm:$0xff]
    %vm255 = vcmask 1045504
    %v256 = vrot.slane %v55, 2
    %v257 = vrot.slane %v56, 2
    %v258 = vsel %vm255, %v256, %v257
    %v259 = vrot.slane %v57, 2
    %v260 = vsel %vm255, %v257, %v259
    %v261 = vrot.slane %v58, 2
    %v262 = vsel %vm255, %v259, %v261
    %v263 = vrot.slane %v59, 2
    %v264 = vsel %vm255, %v261, %v263
    %v265 = vrot.slane %v60, 2
    %v266 = vsel %vm255, %v263, %v265
    %v267 = vrot.slane %v61, 2
    %v268 = vsel %vm255, %v265, %v267
    %v269 = vrot.slane %v62, 2
    %v270 = vsel %vm255, %v267, %v269
    %v271 = vrot.slane %v63, 2
    %v272 = vsel %vm255, %v269, %v271
    %281 = vmatpush.msra.mxu0 %v254
    %282 = vmatpush.msra.mxu0 %v253
    %283 = vmatpush.msra.mxu0 %v252
    %284 = vmatpush.msra.mxu0 %v251
    %285 = vmatpush.msra.mxu0 %v250
    %286 = vmatpush.msra.mxu0 %v249
    %287 = vmatpush.msra.mxu0 %v248
    %288 = vmatpush.msra.mxu0 %v247
    %289 = vmatpush.msra.mxu0 %v246
    %290 = vmatpush.msra.mxu0 %v245
    %291 = vmatpush.msra.mxu0 %v244
    %292 = vmatpush.msra.mxu0 %v243
    %293 = vmatpush.msra.mxu0 %v242
    %294 = vmatpush.msra.mxu0 %v241
    %295 = vmatpush.msra.mxu0 %v240
    %296 = vmatpush.msra.mxu0 %v239
    %297 = vmatmul.f32.gmra.mxu0 %v258
    %v298 = vpop.f32.mrf.mxu0
    %v299 = vadd.f32 0.0, %v298
    %300 = vmatmul.f32.gmra.mxu0 %v260
    %v301 = vpop.f32.mrf.mxu0
    %v302 = vadd.f32 0.0, %v301
    %303 = vmatmul.f32.gmra.mxu0 %v262
    %v304 = vpop.f32.mrf.mxu0
    %v305 = vadd.f32 0.0, %v304
    %306 = vmatmul.f32.gmra.mxu0 %v264
    %v307 = vpop.f32.mrf.mxu0
    %v308 = vadd.f32 0.0, %v307
    %309 = vmatmul.f32.gmra.mxu0 %v266
    %v310 = vpop.f32.mrf.mxu0
    %v311 = vadd.f32 0.0, %v310
    %312 = vmatmul.f32.gmra.mxu0 %v268
    %v313 = vpop.f32.mrf.mxu0
    %v314 = vadd.f32 0.0, %v313
    %315 = vmatmul.f32.gmra.mxu0 %v270
    %v316 = vpop.f32.mrf.mxu0
    %v317 = vadd.f32 0.0, %v316
    %318 = vmatmul.f32.gmra.mxu0 %v272
    %v319 = vpop.f32.mrf.mxu0
    %v320 = vadd.f32 0.0, %v319
    %321 = vdwg.mxu0
    %v322 = vadd.f32 %v230, %v299
    %v323 = vadd.f32 %v231, %v302
    %v324 = vadd.f32 %v232, %v305
    %v325 = vadd.f32 %v233, %v308
    %v326 = vadd.f32 %v234, %v311
    %v327 = vadd.f32 %v235, %v314
    %v328 = vadd.f32 %v236, %v317
    %v329 = vadd.f32 %v237, %v320
    %330 = vst [vmem:[#allocation2] sm:$0xff] %v322
    %331 = vst [vmem:[#allocation2 + $0x8] sm:$0xff] %v323
    %332 = vst [vmem:[#allocation2 + $0x10] sm:$0xff] %v324
    %333 = vst [vmem:[#allocation2 + $0x18] sm:$0xff] %v325
    %334 = vst [vmem:[#allocation2 + $0x20] sm:$0xff] %v326
    %335 = vst [vmem:[#allocation2 + $0x28] sm:$0xff] %v327
    %336 = vst [vmem:[#allocation2 + $0x30] sm:$0xff] %v328
    %337 = vst [vmem:[#allocation2 + $0x38] sm:$0xff] %v329
    %s338 = scalar_lea.vmem %s0, 72
    %v339 = vld [vmem:[%s338] sm:$0xff]
    %v340 = vld [vmem:[%s338 + $0x8] sm:$0xff]
    %v341 = vld [vmem:[%s338 + $0x10] sm:$0xff]
    %v342 = vld [vmem:[%s338 + $0x18] sm:$0xff]
    %v343 = vld [vmem:[%s338 + $0x20] sm:$0xff]
    %v344 = vld [vmem:[%s338 + $0x28] sm:$0xff]
    %v345 = vld [vmem:[%s338 + $0x30] sm:$0xff]
    %v346 = vld [vmem:[%s338 + $0x38] sm:$0xff]
    %v347 = vld [vmem:[%s338 + $0x40] sm:$0x3]
    %s348 = scalar_lea.vmem [#allocation2], 64
    %v349 = vld [vmem:[%s348] sm:$0xff]
    %v350 = vld [vmem:[%s348 + $0x8] sm:$0xff]
    %v351 = vld [vmem:[%s348 + $0x10] sm:$0xff]
    %v352 = vld [vmem:[%s348 + $0x18] sm:$0xff]
    %v353 = vld [vmem:[%s348 + $0x20] sm:$0xff]
    %v354 = vld [vmem:[%s348 + $0x28] sm:$0xff]
    %v355 = vld [vmem:[%s348 + $0x30] sm:$0xff]
    %v356 = vld [vmem:[%s348 + $0x38] sm:$0xff]
    %v357 = vld [vmem:[#allocation3] sm:$0xff]
    %v358 = vld [vmem:[#allocation3 + $0x8] sm:$0xff]
    %v359 = vld [vmem:[#allocation3 + $0x10] sm:$0xff]
    %v360 = vld [vmem:[#allocation3 + $0x18] sm:$0xff]
    %v361 = vld [vmem:[#allocation3 + $0x20] sm:$0xff]
    %v362 = vld [vmem:[#allocation3 + $0x28] sm:$0xff]
    %v363 = vld [vmem:[#allocation3 + $0x30] sm:$0xff]
    %v364 = vld [vmem:[#allocation3 + $0x38] sm:$0xff]
    %v365 = vld [vmem:[#allocation3 + $0x40] sm:$0xff]
    %v366 = vld [vmem:[#allocation3 + $0x48] sm:$0xff]
    %v367 = vld [vmem:[#allocation3 + $0x50] sm:$0xff]
    %v368 = vld [vmem:[#allocation3 + $0x58] sm:$0xff]
    %v369 = vld [vmem:[#allocation3 + $0x60] sm:$0xff]
    %v370 = vld [vmem:[#allocation3 + $0x68] sm:$0xff]
    %v371 = vld [vmem:[#allocation3 + $0x70] sm:$0xff]
    %v372 = vld [vmem:[#allocation3 + $0x78] sm:$0xff]
    %373 = vmatpush.msra.mxu0 %v372
    %374 = vmatpush.msra.mxu0 %v371
    %375 = vmatpush.msra.mxu0 %v370
    %376 = vmatpush.msra.mxu0 %v369
    %377 = vmatpush.msra.mxu0 %v368
    %378 = vmatpush.msra.mxu0 %v367
    %379 = vmatpush.msra.mxu0 %v366
    %380 = vmatpush.msra.mxu0 %v365
    %381 = vmatpush.msra.mxu0 %v364
    %382 = vmatpush.msra.mxu0 %v363
    %383 = vmatpush.msra.mxu0 %v362
    %384 = vmatpush.msra.mxu0 %v361
    %385 = vmatpush.msra.mxu0 %v360
    %386 = vmatpush.msra.mxu0 %v359
    %387 = vmatpush.msra.mxu0 %v358
    %388 = vmatpush.msra.mxu0 %v357
    %389 = vmatmul.f32.gmra.mxu0 %v339
    %v390 = vpop.f32.mrf.mxu0
    %v391 = vadd.f32 0.0, %v390
    %392 = vmatmul.f32.gmra.mxu0 %v340
    %v393 = vpop.f32.mrf.mxu0
    %v394 = vadd.f32 0.0, %v393
    %395 = vmatmul.f32.gmra.mxu0 %v341
    %v396 = vpop.f32.mrf.mxu0
    %v397 = vadd.f32 0.0, %v396
    %398 = vmatmul.f32.gmra.mxu0 %v342
    %v399 = vpop.f32.mrf.mxu0
    %v400 = vadd.f32 0.0, %v399
    %401 = vmatmul.f32.gmra.mxu0 %v343
    %v402 = vpop.f32.mrf.mxu0
    %v403 = vadd.f32 0.0, %v402
    %404 = vmatmul.f32.gmra.mxu0 %v344
    %v405 = vpop.f32.mrf.mxu0
    %v406 = vadd.f32 0.0, %v405
    %407 = vmatmul.f32.gmra.mxu0 %v345
    %v408 = vpop.f32.mrf.mxu0
    %v409 = vadd.f32 0.0, %v408
    %410 = vmatmul.f32.gmra.mxu0 %v346
    %v411 = vpop.f32.mrf.mxu0
    %v412 = vadd.f32 0.0, %v411
    %413 = vdwg.mxu0
    %v414 = vadd.f32 %v349, %v391
    %v415 = vadd.f32 %v350, %v394
    %v416 = vadd.f32 %v351, %v397
    %v417 = vadd.f32 %v352, %v400
    %v418 = vadd.f32 %v353, %v403
    %v419 = vadd.f32 %v354, %v406
    %v420 = vadd.f32 %v355, %v409
    %v421 = vadd.f32 %v356, %v412
    %v422 = vld [vmem:[%s137] sm:$0xff]
    %v423 = vld [vmem:[%s137 + $0x8] sm:$0xff]
    %v424 = vld [vmem:[%s137 + $0x10] sm:$0xff]
    %v425 = vld [vmem:[%s137 + $0x18] sm:$0xff]
    %v426 = vld [vmem:[%s137 + $0x20] sm:$0xff]
    %v427 = vld [vmem:[%s137 + $0x28] sm:$0xff]
    %v428 = vld [vmem:[%s137 + $0x30] sm:$0xff]
    %v429 = vld [vmem:[%s137 + $0x38] sm:$0xff]
    %v430 = vld [vmem:[%s137 + $0x40] sm:$0xff]
    %v431 = vld [vmem:[%s137 + $0x48] sm:$0xff]
    %v432 = vld [vmem:[%s137 + $0x50] sm:$0xff]
    %v433 = vld [vmem:[%s137 + $0x58] sm:$0xff]
    %v434 = vld [vmem:[%s137 + $0x60] sm:$0xff]
    %v435 = vld [vmem:[%s137 + $0x68] sm:$0xff]
    %v436 = vld [vmem:[%s137 + $0x70] sm:$0xff]
    %v437 = vld [vmem:[%s137 + $0x78] sm:$0xff]
    %v447 = vrot.slane %v339, 1
    %v448 = vrot.slane %v340, 1
    %v449 = vsel %vm163, %v447, %v448
    %v450 = vrot.slane %v341, 1
    %v451 = vsel %vm163, %v448, %v450
    %v452 = vrot.slane %v342, 1
    %v453 = vsel %vm163, %v450, %v452
    %v454 = vrot.slane %v343, 1
    %v455 = vsel %vm163, %v452, %v454
    %v456 = vrot.slane %v344, 1
    %v457 = vsel %vm163, %v454, %v456
    %v458 = vrot.slane %v345, 1
    %v459 = vsel %vm163, %v456, %v458
    %v460 = vrot.slane %v346, 1
    %v461 = vsel %vm163, %v458, %v460
    %v462 = vrot.slane %v347, 1
    %v463 = vsel %vm163, %v460, %v462
    %472 = vmatpush.msra.mxu0 %v437
    %473 = vmatpush.msra.mxu0 %v436
    %474 = vmatpush.msra.mxu0 %v435
    %475 = vmatpush.msra.mxu0 %v434
    %476 = vmatpush.msra.mxu0 %v433
    %477 = vmatpush.msra.mxu0 %v432
    %478 = vmatpush.msra.mxu0 %v431
    %479 = vmatpush.msra.mxu0 %v430
    %480 = vmatpush.msra.mxu0 %v429
    %481 = vmatpush.msra.mxu0 %v428
    %482 = vmatpush.msra.mxu0 %v427
    %483 = vmatpush.msra.mxu0 %v426
    %484 = vmatpush.msra.mxu0 %v425
    %485 = vmatpush.msra.mxu0 %v424
    %486 = vmatpush.msra.mxu0 %v423
    %487 = vmatpush.msra.mxu0 %v422
    %488 = vmatmul.f32.gmra.mxu0 %v449
    %v489 = vpop.f32.mrf.mxu0
    %v490 = vadd.f32 0.0, %v489
    %491 = vmatmul.f32.gmra.mxu0 %v451
    %v492 = vpop.f32.mrf.mxu0
    %v493 = vadd.f32 0.0, %v492
    %494 = vmatmul.f32.gmra.mxu0 %v453
    %v495 = vpop.f32.mrf.mxu0
    %v496 = vadd.f32 0.0, %v495
    %497 = vmatmul.f32.gmra.mxu0 %v455
    %v498 = vpop.f32.mrf.mxu0
    %v499 = vadd.f32 0.0, %v498
    %500 = vmatmul.f32.gmra.mxu0 %v457
    %v501 = vpop.f32.mrf.mxu0
    %v502 = vadd.f32 0.0, %v501
    %503 = vmatmul.f32.gmra.mxu0 %v459
    %v504 = vpop.f32.mrf.mxu0
    %v505 = vadd.f32 0.0, %v504
    %506 = vmatmul.f32.gmra.mxu0 %v461
    %v507 = vpop.f32.mrf.mxu0
    %v508 = vadd.f32 0.0, %v507
    %509 = vmatmul.f32.gmra.mxu0 %v463
    %v510 = vpop.f32.mrf.mxu0
    %v511 = vadd.f32 0.0, %v510
    %512 = vdwg.mxu0
    %v513 = vadd.f32 %v414, %v490
    %v514 = vadd.f32 %v415, %v493
    %v515 = vadd.f32 %v416, %v496
    %v516 = vadd.f32 %v417, %v499
    %v517 = vadd.f32 %v418, %v502
    %v518 = vadd.f32 %v419, %v505
    %v519 = vadd.f32 %v420, %v508
    %v520 = vadd.f32 %v421, %v511
    %v521 = vld [vmem:[%s238] sm:$0xff]
    %v522 = vld [vmem:[%s238 + $0x8] sm:$0xff]
    %v523 = vld [vmem:[%s238 + $0x10] sm:$0xff]
    %v524 = vld [vmem:[%s238 + $0x18] sm:$0xff]
    %v525 = vld [vmem:[%s238 + $0x20] sm:$0xff]
    %v526 = vld [vmem:[%s238 + $0x28] sm:$0xff]
    %v527 = vld [vmem:[%s238 + $0x30] sm:$0xff]
    %v528 = vld [vmem:[%s238 + $0x38] sm:$0xff]
    %v529 = vld [vmem:[%s238 + $0x40] sm:$0xff]
    %v530 = vld [vmem:[%s238 + $0x48] sm:$0xff]
    %v531 = vld [vmem:[%s238 + $0x50] sm:$0xff]
    %v532 = vld [vmem:[%s238 + $0x58] sm:$0xff]
    %v533 = vld [vmem:[%s238 + $0x60] sm:$0xff]
    %v534 = vld [vmem:[%s238 + $0x68] sm:$0xff]
    %v535 = vld [vmem:[%s238 + $0x70] sm:$0xff]
    %v536 = vld [vmem:[%s238 + $0x78] sm:$0xff]
    %v537 = vrot.slane %v339, 2
    %v538 = vrot.slane %v340, 2
    %v539 = vsel %vm255, %v537, %v538
    %v540 = vrot.slane %v341, 2
    %v541 = vsel %vm255, %v538, %v540
    %v542 = vrot.slane %v342, 2
    %v543 = vsel %vm255, %v540, %v542
    %v544 = vrot.slane %v343, 2
    %v545 = vsel %vm255, %v542, %v544
    %v546 = vrot.slane %v344, 2
    %v547 = vsel %vm255, %v544, %v546
    %v548 = vrot.slane %v345, 2
    %v549 = vsel %vm255, %v546, %v548
    %v550 = vrot.slane %v346, 2
    %v551 = vsel %vm255, %v548, %v550
    %v552 = vrot.slane %v347, 2
    %v553 = vsel %vm255, %v550, %v552
    %562 = vmatpush.msra.mxu0 %v536
    %563 = vmatpush.msra.mxu0 %v535
    %564 = vmatpush.msra.mxu0 %v534
    %565 = vmatpush.msra.mxu0 %v533
    %566 = vmatpush.msra.mxu0 %v532
    %567 = vmatpush.msra.mxu0 %v531
    %568 = vmatpush.msra.mxu0 %v530
    %569 = vmatpush.msra.mxu0 %v529
    %570 = vmatpush.msra.mxu0 %v528
    %571 = vmatpush.msra.mxu0 %v527
    %572 = vmatpush.msra.mxu0 %v526
    %573 = vmatpush.msra.mxu0 %v525
    %574 = vmatpush.msra.mxu0 %v524
    %575 = vmatpush.msra.mxu0 %v523
    %576 = vmatpush.msra.mxu0 %v522
    %577 = vmatpush.msra.mxu0 %v521
    %578 = vmatmul.f32.gmra.mxu0 %v539
    %v579 = vpop.f32.mrf.mxu0
    %v580 = vadd.f32 0.0, %v579
    %581 = vmatmul.f32.gmra.mxu0 %v541
    %v582 = vpop.f32.mrf.mxu0
    %v583 = vadd.f32 0.0, %v582
    %584 = vmatmul.f32.gmra.mxu0 %v543
    %v585 = vpop.f32.mrf.mxu0
    %v586 = vadd.f32 0.0, %v585
    %587 = vmatmul.f32.gmra.mxu0 %v545
    %v588 = vpop.f32.mrf.mxu0
    %v589 = vadd.f32 0.0, %v588
    %590 = vmatmul.f32.gmra.mxu0 %v547
    %v591 = vpop.f32.mrf.mxu0
    %v592 = vadd.f32 0.0, %v591
    %593 = vmatmul.f32.gmra.mxu0 %v549
    %v594 = vpop.f32.mrf.mxu0
    %v595 = vadd.f32 0.0, %v594
    %596 = vmatmul.f32.gmra.mxu0 %v551
    %v597 = vpop.f32.mrf.mxu0
    %v598 = vadd.f32 0.0, %v597
    %599 = vmatmul.f32.gmra.mxu0 %v553
    %v600 = vpop.f32.mrf.mxu0
    %v601 = vadd.f32 0.0, %v600
    %602 = vdwg.mxu0
    %v603 = vadd.f32 %v513, %v580
    %v604 = vadd.f32 %v514, %v583
    %v605 = vadd.f32 %v515, %v586
    %v606 = vadd.f32 %v516, %v589
    %v607 = vadd.f32 %v517, %v592
    %v608 = vadd.f32 %v518, %v595
    %v609 = vadd.f32 %v519, %v598
    %v610 = vadd.f32 %v520, %v601
    %611 = vst [vmem:[%s348] sm:$0xff] %v603
    %612 = vst [vmem:[%s348 + $0x8] sm:$0xff] %v604
    %613 = vst [vmem:[%s348 + $0x10] sm:$0xff] %v605
    %614 = vst [vmem:[%s348 + $0x18] sm:$0xff] %v606
    %615 = vst [vmem:[%s348 + $0x20] sm:$0xff] %v607
    %616 = vst [vmem:[%s348 + $0x28] sm:$0xff] %v608
    %617 = vst [vmem:[%s348 + $0x30] sm:$0xff] %v609
    %618 = vst [vmem:[%s348 + $0x38] sm:$0xff] %v610
    // Predicated region
    $region22: #{tpu_custom_call.1} parent=1 // pred_check
      %p619 = pneg %p31
    $region23: #{tpu_custom_call.1} parent=1 // pred_check_branch
      %621 = sbr.rel (%p619) target = $region25
    $region24: #{tpu_custom_call.1} parent=1 // pred_region
      %v622 = vld [vmem:[#allocation2] sm:$0xff]
      %v623 = vld [vmem:[#allocation2 + $0x8] sm:$0xff]
      %v624 = vld [vmem:[#allocation2 + $0x10] sm:$0xff]
      %v625 = vld [vmem:[#allocation2 + $0x18] sm:$0xff]
      %v626 = vld [vmem:[#allocation2 + $0x20] sm:$0xff]
      %v627 = vld [vmem:[#allocation2 + $0x28] sm:$0xff]
      %v628 = vld [vmem:[#allocation2 + $0x30] sm:$0xff]
      %v629 = vld [vmem:[#allocation2 + $0x38] sm:$0xff]
      %v630 = vld [vmem:[#allocation2 + $0x40] sm:$0xff]
      %v631 = vld [vmem:[#allocation2 + $0x48] sm:$0xff]
      %v632 = vld [vmem:[#allocation2 + $0x50] sm:$0xff]
      %v633 = vld [vmem:[#allocation2 + $0x58] sm:$0xff]
      %v634 = vld [vmem:[#allocation2 + $0x60] sm:$0xff]
      %v635 = vld [vmem:[#allocation2 + $0x68] sm:$0xff]
      %v636 = vld [vmem:[#allocation2 + $0x70] sm:$0xff]
      %v637 = vld [vmem:[#allocation2 + $0x78] sm:$0xff]
      %638 = vst [vmem:[#allocation6] sm:$0xff] %v622
      %639 = vst [vmem:[#allocation6 + $0x8] sm:$0xff] %v623
      %640 = vst [vmem:[#allocation6 + $0x10] sm:$0xff] %v624
      %641 = vst [vmem:[#allocation6 + $0x18] sm:$0xff] %v625
      %642 = vst [vmem:[#allocation6 + $0x20] sm:$0xff] %v626
      %643 = vst [vmem:[#allocation6 + $0x28] sm:$0xff] %v627
      %644 = vst [vmem:[#allocation6 + $0x30] sm:$0xff] %v628
      %645 = vst [vmem:[#allocation6 + $0x38] sm:$0xff] %v629
      %646 = vst [vmem:[#allocation6 + $0x40] sm:$0xff] %v630
      %647 = vst [vmem:[#allocation6 + $0x48] sm:$0xff] %v631
      %648 = vst [vmem:[#allocation6 + $0x50] sm:$0xff] %v632
      %649 = vst [vmem:[#allocation6 + $0x58] sm:$0xff] %v633
      %650 = vst [vmem:[#allocation6 + $0x60] sm:$0xff] %v634
      %651 = vst [vmem:[#allocation6 + $0x68] sm:$0xff] %v635
      %652 = vst [vmem:[#allocation6 + $0x70] sm:$0xff] %v636
      %653 = vst [vmem:[#allocation6 + $0x78] sm:$0xff] %v637
    $region25: #{tpu_custom_call.1} parent=1 // pred_fallthru
      _
    // Predicated region
    $region26: #{tpu_custom_call.1} parent=1 // pred_check
      _
    $region27: #{tpu_custom_call.1} parent=1 // pred_check_branch
      %655 = sbr.rel (0) target = $region29
    $region28: #{tpu_custom_call.1} parent=1 // pred_region
      %657 = vsyncadd [#allocation5], 0
      %s658 = sshll.u32 [#allocation6], 4
      %s659 = int_to_ptr.vmem [resolvable:$true] %s658
      %s660 = sshll.u32 %s3, 4
      %s661 = int_to_ptr.hbm [resolvable:$true] %s660
      %666 = dma.vmem_to_hbm [thread:$0]  %s659, 2048, %s661, [#allocation5], 128, 128, 8
    $region29: #{tpu_custom_call.1} parent=1 // pred_fallthru
      _
    // Predicated region
    $region30: #{tpu_custom_call.1} parent=1 // pred_check
      _
    $region31: #{tpu_custom_call.1} parent=1 // pred_check_branch
      %668 = sbr.rel (0) target = $region33
    $region32: #{tpu_custom_call.1} parent=1 // pred_region
      %670 = dma.done [#allocation5], 2048
    $region33: #{tpu_custom_call.1} parent=1 // pred_fallthru
      _
    %671 = vsyncpa [#allocation4], 1
    %672 = vsyncpa [#allocation5], 1

</llo_original>
